<compile_context>
chip_gen: v5e
topology: v5e:2x2
jax: 0.10.0
libtpu: 0.0.40
codegen_flags: <defaults>
</compile_context>

<pallas_src>
import jax
import jax.numpy as jnp
from jax.experimental import pallas as pl
from jax.experimental.pallas import tpu as pltpu


def conv1x1_kernel(x_ref, w_ref, b_ref, o_ref):
    # x_ref: (M, C_in)     bf16, full block
    # w_ref: (C_in, C_out) bf16, full block (canonical MXU orientation)
    # b_ref: (1, C_out)    f32
    # o_ref: (M, C_out)    f32
    acc = jnp.dot(x_ref[...], w_ref[...], preferred_element_type=jnp.float32)
    o_ref[...] = (acc + b_ref[...]).astype(o_ref.dtype)


def conv2d_1x1(x_nchw, weight_oikk, bias):
    """1x1 stride-1 Conv2d via a single-step Pallas matmul.

    x_nchw:      [N, C_in, H, W]   float32
    weight_oikk: [C_out, C_in, 1, 1] float32 (PyTorch layout)
    bias:        [C_out]           float32
    returns      [N, C_out, H, W]  float32
    """
    N, C_in, H, W = x_nchw.shape
    C_out = weight_oikk.shape[0]
    M = N * H * W

    # Glue: NCHW -> (M, C_in). Free for H = W = 1 (pure reshape).
    x_mat = jnp.transpose(x_nchw, (0, 2, 3, 1)).reshape(M, C_in)

    # Parameter prep (once per call; constant-folded for static weights):
    # (C_out, C_in, 1, 1) -> (C_in, C_out) so the kernel dot is [M,K]x[K,N].
    w_mat = jnp.transpose(weight_oikk.reshape(C_out, C_in), (1, 0))

    # bf16 operands halve the dominant weight read; f32 accumulate + epilogue.
    x_bf16 = x_mat.astype(jnp.bfloat16)
    w_bf16 = w_mat.astype(jnp.bfloat16)
    b_mat = bias.reshape(1, C_out).astype(jnp.float32)

    bytes_accessed = (
        x_bf16.size * 2 + w_bf16.size * 2 + b_mat.size * 4 + M * C_out * 4
    )
    cost = pl.CostEstimate(
        flops=2 * M * C_in * C_out,
        transcendentals=0,
        bytes_accessed=bytes_accessed,
    )

    out_mat = pl.pallas_call(
        conv1x1_kernel,
        out_shape=jax.ShapeDtypeStruct((M, C_out), jnp.float32),
        in_specs=[
            pl.BlockSpec(memory_space=pltpu.MemorySpace.VMEM),  # x   (full)
            pl.BlockSpec(memory_space=pltpu.MemorySpace.VMEM),  # W   (full)
            pl.BlockSpec(memory_space=pltpu.MemorySpace.VMEM),  # bias(full)
        ],
        out_specs=pl.BlockSpec(memory_space=pltpu.MemorySpace.VMEM),
        cost_estimate=cost,
    )(x_bf16, w_bf16, b_mat)

    # Glue: (M, C_out) -> NCHW.
    return out_mat.reshape(N, H, W, C_out).transpose(0, 3, 1, 2)


if __name__ == "__main__":
    key = jax.random.PRNGKey(0)
    k_x, k_w, k_b = jax.random.split(key, 3)

    N, C_in, H, W = 1, 112, 1, 1
    C_out = 2688

    # Deterministic synthetic parameters (shapes from Conv2d(112, 2688, 1)).
    x = jax.random.normal(k_x, (N, C_in, H, W), dtype=jnp.float32)
    weight = jax.random.normal(k_w, (C_out, C_in, 1, 1), dtype=jnp.float32) * 0.05
    bias = jax.random.normal(k_b, (C_out,), dtype=jnp.float32) * 0.05

    out = conv2d_1x1(x, weight, bias)
    out = jax.block_until_ready(out)

    # Reference check in plain JAX (exact f32 Conv2d forward). Tolerance is
    # loosened because the kernel uses bf16 operands (f32 accumulation).
    ref = (
        jnp.einsum("nchw,oc->nohw", x, weight.reshape(C_out, C_in))
        + bias.reshape(1, C_out, 1, 1)
    )
    assert out.shape == (N, C_out, H, W), out.shape
    assert jnp.allclose(out, ref, atol=2e-2, rtol=2e-2), (
        float(jnp.max(jnp.abs(out - ref)))
    )

    print("KERNEL_OK")
</pallas_src>

<mosaic_0001>
module attributes {stable_mosaic.version = 11 : i64} {
  func.func @conv1x1_kernel(%arg0: memref<1x112xbf16, #tpu.memory_space<vmem>>, %arg1: memref<112x2688xbf16, #tpu.memory_space<vmem>>, %arg2: memref<1x2688xf32, #tpu.memory_space<vmem>>, %arg3: memref<1x2688xf32, #tpu.memory_space<vmem>>) attributes {dimension_semantics = [], scalar_prefetch = 0 : i64, scratch_operands = 0 : i64, tpu.core_type = #tpu.core_type<tc>} {
    %c0 = arith.constant 0 : index
    %c0_0 = arith.constant 0 : index
    %0 = vector.load %arg0[%c0, %c0_0] : memref<1x112xbf16, #tpu.memory_space<vmem>>, vector<1x112xbf16>
    %c0_1 = arith.constant 0 : index
    %c0_2 = arith.constant 0 : index
    %1 = vector.load %arg1[%c0_1, %c0_2] : memref<112x2688xbf16, #tpu.memory_space<vmem>>, vector<112x2688xbf16>
    %cst = arith.constant dense<0.000000e+00> : vector<1x2688xf32>
    %2 = tpu.matmul %0, %1, %cst {dimension_numbers = #tpu.dot_dimension_numbers<[1], [0], [0], [1], [0, 0, 1, 1], [], []>} : vector<1x112xbf16>, vector<112x2688xbf16>, vector<1x2688xf32> -> vector<1x2688xf32>
    %c0_3 = arith.constant 0 : index
    %c0_4 = arith.constant 0 : index
    %3 = vector.load %arg2[%c0_3, %c0_4] : memref<1x2688xf32, #tpu.memory_space<vmem>>, vector<1x2688xf32>
    %4 = arith.addf %2, %3 : vector<1x2688xf32>
    %c0_5 = arith.constant 0 : index
    %c0_6 = arith.constant 0 : index
    %5 = vector.load %arg3[%c0_5, %c0_6] : memref<1x2688xf32, #tpu.memory_space<vmem>>, vector<1x2688xf32>
    tpu.vector_store %arg3[%c0_5, %c0_6], %4 {strides = array<i32>} : memref<1x2688xf32, #tpu.memory_space<vmem>>, vector<1x2688xf32>,
    return
  }
}

</mosaic_0001>

<llo_original>
// kernel: tpu_custom_call.1
$region0: #{tpu_custom_call.1}
  #allocation0 [shape = 'u32[]', space=smem, size = 0x4, offset = 0x4, fixed_abs, tag = 'smem constant byte address 0x4 - core index']
  #allocation1 [shape = 'u32[72,128]{1,0:T(1,128)}', space=vmem, size = 0x9000, scoped, tag = 'internal scratch']
  %s0 = inlined_call_operand.hbm [shape: bf16[1,112], index: 0, kind: input, shape index: {}]
  %s1 = inlined_call_operand.hbm [shape: bf16[112,2688], index: 1, kind: input, shape index: {}]
  %s2 = inlined_call_operand.hbm [shape: f32[1,2688], index: 2, kind: input, shape index: {}]
  %s3 = inlined_call_operand.hbm [shape: f32[1,2688], index: 3, kind: output, shape index: {}]
  %s4 = sld [smem:[#allocation0]]
  $region34: #{tpu_custom_call.1} parent=0
    _
  %s6 = ssub.s32 1, %s4
  %s7 = scalar_select 0, %s6, %s4
  $region1: #{tpu_custom_call.1} parent=0
    #allocation2 [shape = 'u8[512]{0}', space=vmem, size = 0x400, scoped, tag = 'input window, operand 0, single buffered']
    #allocation3 [shape = 's32[1]{0}', space=sflag, size = 0x4, scoped, tag = 'scoped memory for tpu_custom_call.1']
    #allocation4 [shape = 's32[1]{0}', space=sflag, size = 0x4, scoped, tag = 'scoped memory for tpu_custom_call.1']
    #allocation5 [shape = 'u8[602112]{0}', space=vmem, size = 0x93000, scoped, tag = 'input window, operand 1, single buffered']
    #allocation6 [shape = 's32[1]{0}', space=sflag, size = 0x4, scoped, tag = 'scoped memory for tpu_custom_call.1']
    #allocation7 [shape = 'u8[10752]{0}', space=vmem, size = 0x2c00, scoped, tag = 'input window, operand 2, single buffered']
    #allocation8 [shape = 'u8[10752]{0}', space=vmem, size = 0x2c00, scoped, tag = 'output window, operand 0, single buffered']
    %8 = vsyncpa [#allocation3], 0
    %9 = vsyncpa [#allocation6], 0
    %10 = vsyncpa [#allocation4], 0
    // Predicated region
    $region2: #{tpu_custom_call.1} parent=1 // pred_check
      _
    $region3: #{tpu_custom_call.1} parent=1 // pred_check_branch
      %12 = sbr.rel (0) target = $region5
    $region4: #{tpu_custom_call.1} parent=1 // pred_region
      %14 = vsyncadd [#allocation3], 0
      %s16 = sshll.u32 %s0, 4
      %s17 = int_to_ptr.hbm [resolvable:$true] %s16
      %s18 = sshll.u32 [#allocation2], 4
      %s19 = int_to_ptr.vmem [resolvable:$true] %s18
      %21 = dma.hbm_to_vmem [thread:$0]  %s17, 16, %s19, [#allocation3]
    $region5: #{tpu_custom_call.1} parent=1 // pred_fallthru
      _
    // Predicated region
    $region6: #{tpu_custom_call.1} parent=1 // pred_check
      _
    $region7: #{tpu_custom_call.1} parent=1 // pred_check_branch
      %23 = sbr.rel (0) target = $region9
    $region8: #{tpu_custom_call.1} parent=1 // pred_region
      %25 = vsyncadd [#allocation6], 0
      %s26 = sshll.u32 %s1, 4
      %s27 = int_to_ptr.hbm [resolvable:$true] %s26
      %s28 = sshll.u32 [#allocation5], 4
      %s29 = int_to_ptr.vmem [resolvable:$true] %s28
      %34 = dma.hbm_to_vmem [thread:$0]  %s27, 18816, %s29, [#allocation6], 1344, 1344, 84
    $region9: #{tpu_custom_call.1} parent=1 // pred_fallthru
      _
    // Predicated region
    $region10: #{tpu_custom_call.1} parent=1 // pred_check
      _
    $region11: #{tpu_custom_call.1} parent=1 // pred_check_branch
      %36 = sbr.rel (0) target = $region13
    $region12: #{tpu_custom_call.1} parent=1 // pred_region
      %38 = vsyncadd [#allocation6], 0
      %s40 = sshll.u32 %s2, 4
      %s41 = int_to_ptr.hbm [resolvable:$true] %s40
      %s42 = sshll.u32 [#allocation7], 4
      %s43 = int_to_ptr.vmem [resolvable:$true] %s42
      %45 = dma.hbm_to_vmem [thread:$0]  %s41, 336, %s43, [#allocation6]
    $region13: #{tpu_custom_call.1} parent=1 // pred_fallthru
      _
    // Predicated region
    $region14: #{tpu_custom_call.1} parent=1 // pred_check
      _
    $region15: #{tpu_custom_call.1} parent=1 // pred_check_branch
      %47 = sbr.rel (0) target = $region17
    $region16: #{tpu_custom_call.1} parent=1 // pred_region
      %49 = dma.done [#allocation3], 16
    $region17: #{tpu_custom_call.1} parent=1 // pred_fallthru
      _
    // Predicated region
    $region18: #{tpu_custom_call.1} parent=1 // pred_check
      _
    $region19: #{tpu_custom_call.1} parent=1 // pred_check_branch
      %51 = sbr.rel (0) target = $region21
    $region20: #{tpu_custom_call.1} parent=1 // pred_region
      %53 = dma.done [#allocation6], 18816
    $region21: #{tpu_custom_call.1} parent=1 // pred_fallthru
      _
    // Predicated region
    $region22: #{tpu_custom_call.1} parent=1 // pred_check
      _
    $region23: #{tpu_custom_call.1} parent=1 // pred_check_branch
      %55 = sbr.rel (0) target = $region25
    $region24: #{tpu_custom_call.1} parent=1 // pred_region
      %57 = dma.done [#allocation6], 336
    $region25: #{tpu_custom_call.1} parent=1 // pred_fallthru
      _
    %v59 = vld [vmem:[#allocation2] sm:$0x1]
    %v60 = vld [vmem:[#allocation5] sm:$0xff]
    %v61 = vld [vmem:[#allocation5 + $0x8] sm:$0xff]
    %v62 = vld [vmem:[#allocation5 + $0x10] sm:$0xff]
    %v63 = vld [vmem:[#allocation5 + $0x18] sm:$0xff]
    %v64 = vld [vmem:[#allocation5 + $0x20] sm:$0xff]
    %v65 = vld [vmem:[#allocation5 + $0x28] sm:$0xff]
    %v66 = vld [vmem:[#allocation5 + $0x30] sm:$0xff]
    %v67 = vld [vmem:[#allocation5 + $0x38] sm:$0xff]
    %v68 = vld [vmem:[#allocation5 + $0x40] sm:$0xff]
    %v69 = vld [vmem:[#allocation5 + $0x48] sm:$0xff]
    %v70 = vld [vmem:[#allocation5 + $0x50] sm:$0xf]
    %v71 = vld [vmem:[#allocation5 + $0x54] sm:$0xff]
    %v72 = vld [vmem:[#allocation5 + $0x5c] sm:$0xff]
    %v73 = vld [vmem:[#allocation5 + $0x64] sm:$0xff]
    %v74 = vld [vmem:[#allocation5 + $0x6c] sm:$0xff]
    %v75 = vld [vmem:[#allocation5 + $0x74] sm:$0xff]
    %v76 = vld [vmem:[#allocation5 + $0x7c] sm:$0xff]
    %v77 = vld [vmem:[#allocation5 + $0x84] sm:$0xff]
    %v78 = vld [vmem:[#allocation5 + $0x8c] sm:$0xff]
    %v79 = vld [vmem:[#allocation5 + $0x94] sm:$0xff]
    %v80 = vld [vmem:[#allocation5 + $0x9c] sm:$0xff]
    %v81 = vld [vmem:[#allocation5 + $0xa4] sm:$0xf]
    %v82 = vld [vmem:[#allocation5 + $0xa8] sm:$0xff]
    %v83 = vld [vmem:[#allocation5 + $0xb0] sm:$0xff]
    %v84 = vld [vmem:[#allocation5 + $0xb8] sm:$0xff]
    %v85 = vld [vmem:[#allocation5 + $0xc0] sm:$0xff]
    %v86 = vld [vmem:[#allocation5 + $0xc8] sm:$0xff]
    %v87 = vld [vmem:[#allocation5 + $0xd0] sm:$0xff]
    %v88 = vld [vmem:[#allocation5 + $0xd8] sm:$0xff]
    %v89 = vld [vmem:[#allocation5 + $0xe0] sm:$0xff]
    %v90 = vld [vmem:[#allocation5 + $0xe8] sm:$0xff]
    %v91 = vld [vmem:[#allocation5 + $0xf0] sm:$0xff]
    %v92 = vld [vmem:[#allocation5 + $0xf8] sm:$0xf]
    %v93 = vld [vmem:[#allocation5 + $0xfc] sm:$0xff]
    %v94 = vld [vmem:[#allocation5 + $0x104] sm:$0xff]
    %v95 = vld [vmem:[#allocation5 + $0x10c] sm:$0xff]
    %v96 = vld [vmem:[#allocation5 + $0x114] sm:$0xff]
    %v97 = vld [vmem:[#allocation5 + $0x11c] sm:$0xff]
    %v98 = vld [vmem:[#allocation5 + $0x124] sm:$0xff]
    %v99 = vld [vmem:[#allocation5 + $0x12c] sm:$0xff]
    %v100 = vld [vmem:[#allocation5 + $0x134] sm:$0xff]
    %v101 = vld [vmem:[#allocation5 + $0x13c] sm:$0xff]
    %v102 = vld [vmem:[#allocation5 + $0x144] sm:$0xff]
    %v103 = vld [vmem:[#allocation5 + $0x14c] sm:$0xf]
    %v104 = vld [vmem:[#allocation5 + $0x150] sm:$0xff]
    %v105 = vld [vmem:[#allocation5 + $0x158] sm:$0xff]
    %v106 = vld [vmem:[#allocation5 + $0x160] sm:$0xff]
    %v107 = vld [vmem:[#allocation5 + $0x168] sm:$0xff]
    %v108 = vld [vmem:[#allocation5 + $0x170] sm:$0xff]
    %v109 = vld [vmem:[#allocation5 + $0x178] sm:$0xff]
    %v110 = vld [vmem:[#allocation5 + $0x180] sm:$0xff]
    %v111 = vld [vmem:[#allocation5 + $0x188] sm:$0xff]
    %v112 = vld [vmem:[#allocation5 + $0x190] sm:$0xff]
    %v113 = vld [vmem:[#allocation5 + $0x198] sm:$0xff]
    %v114 = vld [vmem:[#allocation5 + $0x1a0] sm:$0xf]
    %v115 = vld [vmem:[#allocation5 + $0x1a4] sm:$0xff]
    %v116 = vld [vmem:[#allocation5 + $0x1ac] sm:$0xff]
    %v117 = vld [vmem:[#allocation5 + $0x1b4] sm:$0xff]
    %v118 = vld [vmem:[#allocation5 + $0x1bc] sm:$0xff]
    %v119 = vld [vmem:[#allocation5 + $0x1c4] sm:$0xff]
    %v120 = vld [vmem:[#allocation5 + $0x1cc] sm:$0xff]
    %v121 = vld [vmem:[#allocation5 + $0x1d4] sm:$0xff]
    %v122 = vld [vmem:[#allocation5 + $0x1dc] sm:$0xff]
    %v123 = vld [vmem:[#allocation5 + $0x1e4] sm:$0xff]
    %v124 = vld [vmem:[#allocation5 + $0x1ec] sm:$0xff]
    %v125 = vld [vmem:[#allocation5 + $0x1f4] sm:$0xf]
    %v126 = vld [vmem:[#allocation5 + $0x1f8] sm:$0xff]
    %v127 = vld [vmem:[#allocation5 + $0x200] sm:$0xff]
    %v128 = vld [vmem:[#allocation5 + $0x208] sm:$0xff]
    %v129 = vld [vmem:[#allocation5 + $0x210] sm:$0xff]
    %v130 = vld [vmem:[#allocation5 + $0x218] sm:$0xff]
    %v131 = vld [vmem:[#allocation5 + $0x220] sm:$0xff]
    %v132 = vld [vmem:[#allocation5 + $0x228] sm:$0xff]
    %v133 = vld [vmem:[#allocation5 + $0x230] sm:$0xff]
    %v134 = vld [vmem:[#allocation5 + $0x238] sm:$0xff]
    %v135 = vld [vmem:[#allocation5 + $0x240] sm:$0xff]
    %v136 = vld [vmem:[#allocation5 + $0x248] sm:$0xf]
    %v137 = vld [vmem:[#allocation5 + $0x24c] sm:$0xff]
    %v138 = vld [vmem:[#allocation5 + $0x254] sm:$0xff]
    %v139 = vld [vmem:[#allocation5 + $0x25c] sm:$0xff]
    %v140 = vld [vmem:[#allocation5 + $0x264] sm:$0xff]
    %v141 = vld [vmem:[#allocation5 + $0x26c] sm:$0xff]
    %v142 = vld [vmem:[#allocation5 + $0x274] sm:$0xff]
    %v143 = vld [vmem:[#allocation5 + $0x27c] sm:$0xff]
    %v144 = vld [vmem:[#allocation5 + $0x284] sm:$0xff]
    %v145 = vld [vmem:[#allocation5 + $0x28c] sm:$0xff]
    %v146 = vld [vmem:[#allocation5 + $0x294] sm:$0xff]
    %v147 = vld [vmem:[#allocation5 + $0x29c] sm:$0xf]
    %v148 = vld [vmem:[#allocation5 + $0x2a0] sm:$0xff]
    %v149 = vld [vmem:[#allocation5 + $0x2a8] sm:$0xff]
    %v150 = vld [vmem:[#allocation5 + $0x2b0] sm:$0xff]
    %v151 = vld [vmem:[#allocation5 + $0x2b8] sm:$0xff]
    %v152 = vld [vmem:[#allocation5 + $0x2c0] sm:$0xff]
    %v153 = vld [vmem:[#allocation5 + $0x2c8] sm:$0xff]
    %v154 = vld [vmem:[#allocation5 + $0x2d0] sm:$0xff]
    %v155 = vld [vmem:[#allocation5 + $0x2d8] sm:$0xff]
    %v156 = vld [vmem:[#allocation5 + $0x2e0] sm:$0xff]
    %v157 = vld [vmem:[#allocation5 + $0x2e8] sm:$0xff]
    %v158 = vld [vmem:[#allocation5 + $0x2f0] sm:$0xf]
    %v159 = vld [vmem:[#allocation5 + $0x2f4] sm:$0xff]
    %v160 = vld [vmem:[#allocation5 + $0x2fc] sm:$0xff]
    %v161 = vld [vmem:[#allocation5 + $0x304] sm:$0xff]
    %v162 = vld [vmem:[#allocation5 + $0x30c] sm:$0xff]
    %v163 = vld [vmem:[#allocation5 + $0x314] sm:$0xff]
    %v164 = vld [vmem:[#allocation5 + $0x31c] sm:$0xff]
    %v165 = vld [vmem:[#allocation5 + $0x324] sm:$0xff]
    %v166 = vld [vmem:[#allocation5 + $0x32c] sm:$0xff]
    %v167 = vld [vmem:[#allocation5 + $0x334] sm:$0xff]
    %v168 = vld [vmem:[#allocation5 + $0x33c] sm:$0xff]
    %v169 = vld [vmem:[#allocation5 + $0x344] sm:$0xf]
    %v170 = vld [vmem:[#allocation5 + $0x348] sm:$0xff]
    %v171 = vld [vmem:[#allocation5 + $0x350] sm:$0xff]
    %v172 = vld [vmem:[#allocation5 + $0x358] sm:$0xff]
    %v173 = vld [vmem:[#allocation5 + $0x360] sm:$0xff]
    %v174 = vld [vmem:[#allocation5 + $0x368] sm:$0xff]
    %v175 = vld [vmem:[#allocation5 + $0x370] sm:$0xff]
    %v176 = vld [vmem:[#allocation5 + $0x378] sm:$0xff]
    %v177 = vld [vmem:[#allocation5 + $0x380] sm:$0xff]
    %v178 = vld [vmem:[#allocation5 + $0x388] sm:$0xff]
    %v179 = vld [vmem:[#allocation5 + $0x390] sm:$0xff]
    %v180 = vld [vmem:[#allocation5 + $0x398] sm:$0xf]
    %v181 = vld [vmem:[#allocation5 + $0x39c] sm:$0xff]
    %v182 = vld [vmem:[#allocation5 + $0x3a4] sm:$0xff]
    %v183 = vld [vmem:[#allocation5 + $0x3ac] sm:$0xff]
    %v184 = vld [vmem:[#allocation5 + $0x3b4] sm:$0xff]
    %v185 = vld [vmem:[#allocation5 + $0x3bc] sm:$0xff]
    %v186 = vld [vmem:[#allocation5 + $0x3c4] sm:$0xff]
    %v187 = vld [vmem:[#allocation5 + $0x3cc] sm:$0xff]
    %v188 = vld [vmem:[#allocation5 + $0x3d4] sm:$0xff]
    %v189 = vld [vmem:[#allocation5 + $0x3dc] sm:$0xff]
    %v190 = vld [vmem:[#allocation5 + $0x3e4] sm:$0xff]
    %v191 = vld [vmem:[#allocation5 + $0x3ec] sm:$0xf]
    %v192 = vld [vmem:[#allocation5 + $0x3f0] sm:$0xff]
    %v193 = vld [vmem:[#allocation5 + $0x3f8] sm:$0xff]
    %v194 = vld [vmem:[#allocation5 + $0x400] sm:$0xff]
    %v195 = vld [vmem:[#allocation5 + $0x408] sm:$0xff]
    %v196 = vld [vmem:[#allocation5 + $0x410] sm:$0xff]
    %v197 = vld [vmem:[#allocation5 + $0x418] sm:$0xff]
    %v198 = vld [vmem:[#allocation5 + $0x420] sm:$0xff]
    %v199 = vld [vmem:[#allocation5 + $0x428] sm:$0xff]
    %v200 = vld [vmem:[#allocation5 + $0x430] sm:$0xff]
    %v201 = vld [vmem:[#allocation5 + $0x438] sm:$0xff]
    %v202 = vld [vmem:[#allocation5 + $0x440] sm:$0xf]
    %v203 = vld [vmem:[#allocation5 + $0x444] sm:$0xff]
    %v204 = vld [vmem:[#allocation5 + $0x44c] sm:$0xff]
    %v205 = vld [vmem:[#allocation5 + $0x454] sm:$0xff]
    %v206 = vld [vmem:[#allocation5 + $0x45c] sm:$0xff]
    %v207 = vld [vmem:[#allocation5 + $0x464] sm:$0xff]
    %v208 = vld [vmem:[#allocation5 + $0x46c] sm:$0xff]
    %v209 = vld [vmem:[#allocation5 + $0x474] sm:$0xff]
    %v210 = vld [vmem:[#allocation5 + $0x47c] sm:$0xff]
    %v211 = vld [vmem:[#allocation5 + $0x484] sm:$0xff]
    %v212 = vld [vmem:[#allocation5 + $0x48c] sm:$0xff]
    %v213 = vld [vmem:[#allocation5 + $0x494] sm:$0xf]
    %v214 = vld [vmem:[#allocation7] sm:$0xff]
    %v215 = vld [vmem:[#allocation7 + $0x8] sm:$0xff]
    %v216 = vld [vmem:[#allocation7 + $0x10] sm:$0x1f]
    %v371 = vunpack.c.l.b16 %v60
    %v372 = vunpack.c.h.b16 %v60
    %v373 = vunpack.c.l.b16 %v61
    %v374 = vunpack.c.h.b16 %v61
    %v375 = vunpack.c.l.b16 %v62
    %v376 = vunpack.c.h.b16 %v62
    %v377 = vunpack.c.l.b16 %v63
    %v378 = vunpack.c.h.b16 %v63
    %v379 = vunpack.c.l.b16 %v64
    %v380 = vunpack.c.h.b16 %v64
    %v381 = vunpack.c.l.b16 %v65
    %v382 = vunpack.c.h.b16 %v65
    %v383 = vunpack.c.l.b16 %v66
    %v384 = vunpack.c.h.b16 %v66
    %v385 = vunpack.c.l.b16 %v67
    %v386 = vunpack.c.h.b16 %v67
    %v387 = vunpack.c.l.b16 %v68
    %v388 = vunpack.c.h.b16 %v68
    %v389 = vunpack.c.l.b16 %v69
    %v390 = vunpack.c.h.b16 %v69
    %v391 = vunpack.c.l.b16 %v70
    %v392 = vunpack.c.l.b16 %v71
    %v393 = vunpack.c.h.b16 %v71
    %v394 = vunpack.c.l.b16 %v72
    %v395 = vunpack.c.h.b16 %v72
    %v396 = vunpack.c.l.b16 %v73
    %v397 = vunpack.c.h.b16 %v73
    %v398 = vunpack.c.l.b16 %v74
    %v399 = vunpack.c.h.b16 %v74
    %v400 = vunpack.c.l.b16 %v75
    %v401 = vunpack.c.h.b16 %v75
    %v402 = vunpack.c.l.b16 %v76
    %v403 = vunpack.c.h.b16 %v76
    %v404 = vunpack.c.l.b16 %v77
    %v405 = vunpack.c.h.b16 %v77
    %v406 = vunpack.c.l.b16 %v78
    %v407 = vunpack.c.h.b16 %v78
    %v408 = vunpack.c.l.b16 %v79
    %v409 = vunpack.c.h.b16 %v79
    %v410 = vunpack.c.l.b16 %v80
    %v411 = vunpack.c.h.b16 %v80
    %v412 = vunpack.c.l.b16 %v81
    %v413 = vunpack.c.l.b16 %v82
    %v414 = vunpack.c.h.b16 %v82
    %v415 = vunpack.c.l.b16 %v83
    %v416 = vunpack.c.h.b16 %v83
    %v417 = vunpack.c.l.b16 %v84
    %v418 = vunpack.c.h.b16 %v84
    %v419 = vunpack.c.l.b16 %v85
    %v420 = vunpack.c.h.b16 %v85
    %v421 = vunpack.c.l.b16 %v86
    %v422 = vunpack.c.h.b16 %v86
    %v423 = vunpack.c.l.b16 %v87
    %v424 = vunpack.c.h.b16 %v87
    %v425 = vunpack.c.l.b16 %v88
    %v426 = vunpack.c.h.b16 %v88
    %v427 = vunpack.c.l.b16 %v89
    %v428 = vunpack.c.h.b16 %v89
    %v429 = vunpack.c.l.b16 %v90
    %v430 = vunpack.c.h.b16 %v90
    %v431 = vunpack.c.l.b16 %v91
    %v432 = vunpack.c.h.b16 %v91
    %v433 = vunpack.c.l.b16 %v92
    %v434 = vunpack.c.l.b16 %v93
    %v435 = vunpack.c.h.b16 %v93
    %v436 = vunpack.c.l.b16 %v94
    %v437 = vunpack.c.h.b16 %v94
    %v438 = vunpack.c.l.b16 %v95
    %v439 = vunpack.c.h.b16 %v95
    %v440 = vunpack.c.l.b16 %v96
    %v441 = vunpack.c.h.b16 %v96
    %v442 = vunpack.c.l.b16 %v97
    %v443 = vunpack.c.h.b16 %v97
    %v444 = vunpack.c.l.b16 %v98
    %v445 = vunpack.c.h.b16 %v98
    %v446 = vunpack.c.l.b16 %v99
    %v447 = vunpack.c.h.b16 %v99
    %v448 = vunpack.c.l.b16 %v100
    %v449 = vunpack.c.h.b16 %v100
    %v450 = vunpack.c.l.b16 %v101
    %v451 = vunpack.c.h.b16 %v101
    %v452 = vunpack.c.l.b16 %v102
    %v453 = vunpack.c.h.b16 %v102
    %v454 = vunpack.c.l.b16 %v103
    %v455 = vunpack.c.l.b16 %v104
    %v456 = vunpack.c.h.b16 %v104
    %v457 = vunpack.c.l.b16 %v105
    %v458 = vunpack.c.h.b16 %v105
    %v459 = vunpack.c.l.b16 %v106
    %v460 = vunpack.c.h.b16 %v106
    %v461 = vunpack.c.l.b16 %v107
    %v462 = vunpack.c.h.b16 %v107
    %v463 = vunpack.c.l.b16 %v108
    %v464 = vunpack.c.h.b16 %v108
    %v465 = vunpack.c.l.b16 %v109
    %v466 = vunpack.c.h.b16 %v109
    %v467 = vunpack.c.l.b16 %v110
    %v468 = vunpack.c.h.b16 %v110
    %v469 = vunpack.c.l.b16 %v111
    %v470 = vunpack.c.h.b16 %v111
    %v471 = vunpack.c.l.b16 %v112
    %v472 = vunpack.c.h.b16 %v112
    %v473 = vunpack.c.l.b16 %v113
    %v474 = vunpack.c.h.b16 %v113
    %v475 = vunpack.c.l.b16 %v114
    %v476 = vunpack.c.l.b16 %v115
    %v477 = vunpack.c.h.b16 %v115
    %v478 = vunpack.c.l.b16 %v116
    %v479 = vunpack.c.h.b16 %v116
    %v480 = vunpack.c.l.b16 %v117
    %v481 = vunpack.c.h.b16 %v117
    %v482 = vunpack.c.l.b16 %v118
    %v483 = vunpack.c.h.b16 %v118
    %v484 = vunpack.c.l.b16 %v119
    %v485 = vunpack.c.h.b16 %v119
    %v486 = vunpack.c.l.b16 %v120
    %v487 = vunpack.c.h.b16 %v120
    %v488 = vunpack.c.l.b16 %v121
    %v489 = vunpack.c.h.b16 %v121
    %v490 = vunpack.c.l.b16 %v122
    %v491 = vunpack.c.h.b16 %v122
    %v492 = vunpack.c.l.b16 %v123
    %v493 = vunpack.c.h.b16 %v123
    %v494 = vunpack.c.l.b16 %v124
    %v495 = vunpack.c.h.b16 %v124
    %v496 = vunpack.c.l.b16 %v125
    %v497 = vunpack.c.l.b16 %v126
    %v498 = vunpack.c.h.b16 %v126
    %v499 = vunpack.c.l.b16 %v127
    %v500 = vunpack.c.h.b16 %v127
    %v501 = vunpack.c.l.b16 %v128
    %v502 = vunpack.c.h.b16 %v128
    %v503 = vunpack.c.l.b16 %v129
    %v504 = vunpack.c.h.b16 %v129
    %v505 = vunpack.c.l.b16 %v130
    %v506 = vunpack.c.h.b16 %v130
    %v507 = vunpack.c.l.b16 %v131
    %v508 = vunpack.c.h.b16 %v131
    %v509 = vunpack.c.l.b16 %v132
    %v510 = vunpack.c.h.b16 %v132
    %v511 = vunpack.c.l.b16 %v133
    %v512 = vunpack.c.h.b16 %v133
    %v513 = vunpack.c.l.b16 %v134
    %v514 = vunpack.c.h.b16 %v134
    %v515 = vunpack.c.l.b16 %v135
    %v516 = vunpack.c.h.b16 %v135
    %v517 = vunpack.c.l.b16 %v136
    %v518 = vunpack.c.l.b16 %v137
    %v519 = vunpack.c.h.b16 %v137
    %v520 = vunpack.c.l.b16 %v138
    %v521 = vunpack.c.h.b16 %v138
    %v522 = vunpack.c.l.b16 %v139
    %v523 = vunpack.c.h.b16 %v139
    %v524 = vunpack.c.l.b16 %v140
    %v525 = vunpack.c.h.b16 %v140
    %v526 = vunpack.c.l.b16 %v141
    %v527 = vunpack.c.h.b16 %v141
    %v528 = vunpack.c.l.b16 %v142
    %v529 = vunpack.c.h.b16 %v142
    %v530 = vunpack.c.l.b16 %v143
    %v531 = vunpack.c.h.b16 %v143
    %v532 = vunpack.c.l.b16 %v144
    %v533 = vunpack.c.h.b16 %v144
    %v534 = vunpack.c.l.b16 %v145
    %v535 = vunpack.c.h.b16 %v145
    %v536 = vunpack.c.l.b16 %v146
    %v537 = vunpack.c.h.b16 %v146
    %v538 = vunpack.c.l.b16 %v147
    %v539 = vunpack.c.l.b16 %v148
    %v540 = vunpack.c.h.b16 %v148
    %v541 = vunpack.c.l.b16 %v149
    %v542 = vunpack.c.h.b16 %v149
    %v543 = vunpack.c.l.b16 %v150
    %v544 = vunpack.c.h.b16 %v150
    %v545 = vunpack.c.l.b16 %v151
    %v546 = vunpack.c.h.b16 %v151
    %v547 = vunpack.c.l.b16 %v152
    %v548 = vunpack.c.h.b16 %v152
    %v549 = vunpack.c.l.b16 %v153
    %v550 = vunpack.c.h.b16 %v153
    %v551 = vunpack.c.l.b16 %v154
    %v552 = vunpack.c.h.b16 %v154
    %v553 = vunpack.c.l.b16 %v155
    %v554 = vunpack.c.h.b16 %v155
    %v555 = vunpack.c.l.b16 %v156
    %v556 = vunpack.c.h.b16 %v156
    %v557 = vunpack.c.l.b16 %v157
    %v558 = vunpack.c.h.b16 %v157
    %v559 = vunpack.c.l.b16 %v158
    %v560 = vunpack.c.l.b16 %v159
    %v561 = vunpack.c.h.b16 %v159
    %v562 = vunpack.c.l.b16 %v160
    %v563 = vunpack.c.h.b16 %v160
    %v564 = vunpack.c.l.b16 %v161
    %v565 = vunpack.c.h.b16 %v161
    %v566 = vunpack.c.l.b16 %v162
    %v567 = vunpack.c.h.b16 %v162
    %v568 = vunpack.c.l.b16 %v163
    %v569 = vunpack.c.h.b16 %v163
    %v570 = vunpack.c.l.b16 %v164
    %v571 = vunpack.c.h.b16 %v164
    %v572 = vunpack.c.l.b16 %v165
    %v573 = vunpack.c.h.b16 %v165
    %v574 = vunpack.c.l.b16 %v166
    %v575 = vunpack.c.h.b16 %v166
    %v576 = vunpack.c.l.b16 %v167
    %v577 = vunpack.c.h.b16 %v167
    %v578 = vunpack.c.l.b16 %v168
    %v579 = vunpack.c.h.b16 %v168
    %v580 = vunpack.c.l.b16 %v169
    %v581 = vunpack.c.l.b16 %v170
    %v582 = vunpack.c.h.b16 %v170
    %v583 = vunpack.c.l.b16 %v171
    %v584 = vunpack.c.h.b16 %v171
    %v585 = vunpack.c.l.b16 %v172
    %v586 = vunpack.c.h.b16 %v172
    %v587 = vunpack.c.l.b16 %v173
    %v588 = vunpack.c.h.b16 %v173
    %v589 = vunpack.c.l.b16 %v174
    %v590 = vunpack.c.h.b16 %v174
    %v591 = vunpack.c.l.b16 %v175
    %v592 = vunpack.c.h.b16 %v175
    %v593 = vunpack.c.l.b16 %v176
    %v594 = vunpack.c.h.b16 %v176
    %v595 = vunpack.c.l.b16 %v177
    %v596 = vunpack.c.h.b16 %v177
    %v597 = vunpack.c.l.b16 %v178
    %v598 = vunpack.c.h.b16 %v178
    %v599 = vunpack.c.l.b16 %v179
    %v600 = vunpack.c.h.b16 %v179
    %v601 = vunpack.c.l.b16 %v180
    %v602 = vunpack.c.l.b16 %v181
    %v603 = vunpack.c.h.b16 %v181
    %v604 = vunpack.c.l.b16 %v182
    %v605 = vunpack.c.h.b16 %v182
    %v606 = vunpack.c.l.b16 %v183
    %v607 = vunpack.c.h.b16 %v183
    %v608 = vunpack.c.l.b16 %v184
    %v609 = vunpack.c.h.b16 %v184
    %v610 = vunpack.c.l.b16 %v185
    %v611 = vunpack.c.h.b16 %v185
    %v612 = vunpack.c.l.b16 %v186
    %v613 = vunpack.c.h.b16 %v186
    %v614 = vunpack.c.l.b16 %v187
    %v615 = vunpack.c.h.b16 %v187
    %v616 = vunpack.c.l.b16 %v188
    %v617 = vunpack.c.h.b16 %v188
    %v618 = vunpack.c.l.b16 %v189
    %v619 = vunpack.c.h.b16 %v189
    %v620 = vunpack.c.l.b16 %v190
    %v621 = vunpack.c.h.b16 %v190
    %v622 = vunpack.c.l.b16 %v191
    %v623 = vunpack.c.l.b16 %v192
    %v624 = vunpack.c.h.b16 %v192
    %v625 = vunpack.c.l.b16 %v193
    %v626 = vunpack.c.h.b16 %v193
    %v627 = vunpack.c.l.b16 %v194
    %v628 = vunpack.c.h.b16 %v194
    %v629 = vunpack.c.l.b16 %v195
    %v630 = vunpack.c.h.b16 %v195
    %v631 = vunpack.c.l.b16 %v196
    %v632 = vunpack.c.h.b16 %v196
    %v633 = vunpack.c.l.b16 %v197
    %v634 = vunpack.c.h.b16 %v197
    %v635 = vunpack.c.l.b16 %v198
    %v636 = vunpack.c.h.b16 %v198
    %v637 = vunpack.c.l.b16 %v199
    %v638 = vunpack.c.h.b16 %v199
    %v639 = vunpack.c.l.b16 %v200
    %v640 = vunpack.c.h.b16 %v200
    %v641 = vunpack.c.l.b16 %v201
    %v642 = vunpack.c.h.b16 %v201
    %v643 = vunpack.c.l.b16 %v202
    %v644 = vunpack.c.l.b16 %v203
    %v645 = vunpack.c.h.b16 %v203
    %v646 = vunpack.c.l.b16 %v204
    %v647 = vunpack.c.h.b16 %v204
    %v648 = vunpack.c.l.b16 %v205
    %v649 = vunpack.c.h.b16 %v205
    %v650 = vunpack.c.l.b16 %v206
    %v651 = vunpack.c.h.b16 %v206
    %v652 = vunpack.c.l.b16 %v207
    %v653 = vunpack.c.h.b16 %v207
    %v654 = vunpack.c.l.b16 %v208
    %v655 = vunpack.c.h.b16 %v208
    %v656 = vunpack.c.l.b16 %v209
    %v657 = vunpack.c.h.b16 %v209
    %v658 = vunpack.c.l.b16 %v210
    %v659 = vunpack.c.h.b16 %v210
    %v660 = vunpack.c.l.b16 %v211
    %v661 = vunpack.c.h.b16 %v211
    %v662 = vunpack.c.l.b16 %v212
    %v663 = vunpack.c.h.b16 %v212
    %v664 = vunpack.c.l.b16 %v213
    %v665 = vpack.c.b16 %v392, %v371
    %v666 = vpack.c.b16 %v393, %v372
    %v667 = vpack.c.b16 %v394, %v373
    %v668 = vpack.c.b16 %v395, %v374
    %v669 = vpack.c.b16 %v396, %v375
    %v670 = vpack.c.b16 %v397, %v376
    %v671 = vpack.c.b16 %v398, %v377
    %v672 = vpack.c.b16 %v399, %v378
    %v673 = vpack.c.b16 %v400, %v379
    %v674 = vpack.c.b16 %v401, %v380
    %v675 = vpack.c.b16 %v402, %v381
    %v676 = vpack.c.b16 %v403, %v382
    %v677 = vpack.c.b16 %v404, %v383
    %v678 = vpack.c.b16 %v405, %v384
    %v679 = vpack.c.b16 %v406, %v385
    %v680 = vpack.c.b16 %v407, %v386
    %v681 = vpack.c.b16 %v408, %v387
    %v682 = vpack.c.b16 %v409, %v388
    %v683 = vpack.c.b16 %v410, %v389
    %v684 = vpack.c.b16 %v411, %v390
    %v685 = vpack.c.b16 %v412, %v391
    %v686 = vpack.c.b16 %v434, %v413
    %v687 = vpack.c.b16 %v435, %v414
    %v688 = vpack.c.b16 %v436, %v415
    %v689 = vpack.c.b16 %v437, %v416
    %v690 = vpack.c.b16 %v438, %v417
    %v691 = vpack.c.b16 %v439, %v418
    %v692 = vpack.c.b16 %v440, %v419
    %v693 = vpack.c.b16 %v441, %v420
    %v694 = vpack.c.b16 %v442, %v421
    %v695 = vpack.c.b16 %v443, %v422
    %v696 = vpack.c.b16 %v444, %v423
    %v697 = vpack.c.b16 %v445, %v424
    %v698 = vpack.c.b16 %v446, %v425
    %v699 = vpack.c.b16 %v447, %v426
    %v700 = vpack.c.b16 %v448, %v427
    %v701 = vpack.c.b16 %v449, %v428
    %v702 = vpack.c.b16 %v450, %v429
    %v703 = vpack.c.b16 %v451, %v430
    %v704 = vpack.c.b16 %v452, %v431
    %v705 = vpack.c.b16 %v453, %v432
    %v706 = vpack.c.b16 %v454, %v433
    %v707 = vpack.c.b16 %v476, %v455
    %v708 = vpack.c.b16 %v477, %v456
    %v709 = vpack.c.b16 %v478, %v457
    %v710 = vpack.c.b16 %v479, %v458
    %v711 = vpack.c.b16 %v480, %v459
    %v712 = vpack.c.b16 %v481, %v460
    %v713 = vpack.c.b16 %v482, %v461
    %v714 = vpack.c.b16 %v483, %v462
    %v715 = vpack.c.b16 %v484, %v463
    %v716 = vpack.c.b16 %v485, %v464
    %v717 = vpack.c.b16 %v486, %v465
    %v718 = vpack.c.b16 %v487, %v466
    %v719 = vpack.c.b16 %v488, %v467
    %v720 = vpack.c.b16 %v489, %v468
    %v721 = vpack.c.b16 %v490, %v469
    %v722 = vpack.c.b16 %v491, %v470
    %v723 = vpack.c.b16 %v492, %v471
    %v724 = vpack.c.b16 %v493, %v472
    %v725 = vpack.c.b16 %v494, %v473
    %v726 = vpack.c.b16 %v495, %v474
    %v727 = vpack.c.b16 %v496, %v475
    %v728 = vpack.c.b16 %v518, %v497
    %v729 = vpack.c.b16 %v519, %v498
    %v730 = vpack.c.b16 %v520, %v499
    %v731 = vpack.c.b16 %v521, %v500
    %v732 = vpack.c.b16 %v522, %v501
    %v733 = vpack.c.b16 %v523, %v502
    %v734 = vpack.c.b16 %v524, %v503
    %v735 = vpack.c.b16 %v525, %v504
    %v736 = vpack.c.b16 %v526, %v505
    %v737 = vpack.c.b16 %v527, %v506
    %v738 = vpack.c.b16 %v528, %v507
    %v739 = vpack.c.b16 %v529, %v508
    %v740 = vpack.c.b16 %v530, %v509
    %v741 = vpack.c.b16 %v531, %v510
    %v742 = vpack.c.b16 %v532, %v511
    %v743 = vpack.c.b16 %v533, %v512
    %v744 = vpack.c.b16 %v534, %v513
    %v745 = vpack.c.b16 %v535, %v514
    %v746 = vpack.c.b16 %v536, %v515
    %v747 = vpack.c.b16 %v537, %v516
    %v748 = vpack.c.b16 %v538, %v517
    %v749 = vpack.c.b16 %v560, %v539
    %v750 = vpack.c.b16 %v561, %v540
    %v751 = vpack.c.b16 %v562, %v541
    %v752 = vpack.c.b16 %v563, %v542
    %v753 = vpack.c.b16 %v564, %v543
    %v754 = vpack.c.b16 %v565, %v544
    %v755 = vpack.c.b16 %v566, %v545
    %v756 = vpack.c.b16 %v567, %v546
    %v757 = vpack.c.b16 %v568, %v547
    %v758 = vpack.c.b16 %v569, %v548
    %v759 = vpack.c.b16 %v570, %v549
    %v760 = vpack.c.b16 %v571, %v550
    %v761 = vpack.c.b16 %v572, %v551
    %v762 = vpack.c.b16 %v573, %v552
    %v763 = vpack.c.b16 %v574, %v553
    %v764 = vpack.c.b16 %v575, %v554
    %v765 = vpack.c.b16 %v576, %v555
    %v766 = vpack.c.b16 %v577, %v556
    %v767 = vpack.c.b16 %v578, %v557
    %v768 = vpack.c.b16 %v579, %v558
    %v769 = vpack.c.b16 %v580, %v559
    %v770 = vpack.c.b16 %v602, %v581
    %v771 = vpack.c.b16 %v603, %v582
    %v772 = vpack.c.b16 %v604, %v583
    %v773 = vpack.c.b16 %v605, %v584
    %v774 = vpack.c.b16 %v606, %v585
    %v775 = vpack.c.b16 %v607, %v586
    %v776 = vpack.c.b16 %v608, %v587
    %v777 = vpack.c.b16 %v609, %v588
    %v778 = vpack.c.b16 %v610, %v589
    %v779 = vpack.c.b16 %v611, %v590
    %v780 = vpack.c.b16 %v612, %v591
    %v781 = vpack.c.b16 %v613, %v592
    %v782 = vpack.c.b16 %v614, %v593
    %v783 = vpack.c.b16 %v615, %v594
    %v784 = vpack.c.b16 %v616, %v595
    %v785 = vpack.c.b16 %v617, %v596
    %v786 = vpack.c.b16 %v618, %v597
    %v787 = vpack.c.b16 %v619, %v598
    %v788 = vpack.c.b16 %v620, %v599
    %v789 = vpack.c.b16 %v621, %v600
    %v790 = vpack.c.b16 %v622, %v601
    %v791 = vpack.c.b16 %v644, %v623
    %v792 = vpack.c.b16 %v645, %v624
    %v793 = vpack.c.b16 %v646, %v625
    %v794 = vpack.c.b16 %v647, %v626
    %v795 = vpack.c.b16 %v648, %v627
    %v796 = vpack.c.b16 %v649, %v628
    %v797 = vpack.c.b16 %v650, %v629
    %v798 = vpack.c.b16 %v651, %v630
    %v799 = vpack.c.b16 %v652, %v631
    %v800 = vpack.c.b16 %v653, %v632
    %v801 = vpack.c.b16 %v654, %v633
    %v802 = vpack.c.b16 %v655, %v634
    %v803 = vpack.c.b16 %v656, %v635
    %v804 = vpack.c.b16 %v657, %v636
    %v805 = vpack.c.b16 %v658, %v637
    %v806 = vpack.c.b16 %v659, %v638
    %v807 = vpack.c.b16 %v660, %v639
    %v808 = vpack.c.b16 %v661, %v640
    %v809 = vpack.c.b16 %v662, %v641
    %v810 = vpack.c.b16 %v663, %v642
    %v811 = vpack.c.b16 %v664, %v643
    %v962 = vperm.slane %v214, 0
    %v963 = vperm.slane %v214, 1
    %v964 = vperm.slane %v214, 2
    %v965 = vperm.slane %v214, 3
    %v966 = vperm.slane %v214, 4
    %v967 = vperm.slane %v214, 5
    %v968 = vperm.slane %v214, 6
    %v969 = vperm.slane %v214, 7
    %v970 = vperm.slane %v215, 0
    %v971 = vperm.slane %v215, 1
    %v972 = vperm.slane %v215, 2
    %v973 = vperm.slane %v215, 3
    %v974 = vperm.slane %v215, 4
    %v975 = vperm.slane %v215, 5
    %v976 = vperm.slane %v215, 6
    %v977 = vperm.slane %v215, 7
    %v978 = vperm.slane %v216, 0
    %v979 = vperm.slane %v216, 1
    %v980 = vperm.slane %v216, 2
    %v981 = vperm.slane %v216, 3
    %v982 = vperm.slane %v216, 4
    %vm1004 = vcmask 916480
    %v1006 = vsel %vm1004, %v59, 0
    %1008 = vmatpush.bf16.msra.mxu0 0
    %1009 = vmatpush.bf16.msra.mxu0 %v791
    %1010 = vmatpush.bf16.msra.mxu0 %v770
    %1011 = vmatpush.bf16.msra.mxu0 %v749
    %1012 = vmatpush.bf16.msra.mxu0 %v728
    %1013 = vmatpush.bf16.msra.mxu0 %v707
    %1014 = vmatpush.bf16.msra.mxu0 %v686
    %1015 = vmatpush.bf16.msra.mxu0 %v665
    %1016 = vmatmul.bf16.gmra.mxu0 %v1006
    %v1017 = vpop.f32.mrf.mxu0
    %v1018 = vadd.f32 %v962, %v1017
    %v1019 = vpop.f32.mrf.mxu0
    %1020 = vdwg.mxu0
    %1021 = vmatpush.bf16.msra.mxu0 0
    %1022 = vmatpush.bf16.msra.mxu0 %v792
    %1023 = vmatpush.bf16.msra.mxu0 %v771
    %1024 = vmatpush.bf16.msra.mxu0 %v750
    %1025 = vmatpush.bf16.msra.mxu0 %v729
    %1026 = vmatpush.bf16.msra.mxu0 %v708
    %1027 = vmatpush.bf16.msra.mxu0 %v687
    %1028 = vmatpush.bf16.msra.mxu0 %v666
    %1029 = vmatmul.bf16.gmra.mxu0 %v1006
    %v1030 = vpop.f32.mrf.mxu0
    %v1031 = vadd.f32 %v963, %v1030
    %v1032 = vpop.f32.mrf.mxu0
    %1033 = vdwg.mxu0
    %1034 = vmatpush.bf16.msra.mxu0 0
    %1035 = vmatpush.bf16.msra.mxu0 %v793
    %1036 = vmatpush.bf16.msra.mxu0 %v772
    %1037 = vmatpush.bf16.msra.mxu0 %v751
    %1038 = vmatpush.bf16.msra.mxu0 %v730
    %1039 = vmatpush.bf16.msra.mxu0 %v709
    %1040 = vmatpush.bf16.msra.mxu0 %v688
    %1041 = vmatpush.bf16.msra.mxu0 %v667
    %1042 = vmatmul.bf16.gmra.mxu0 %v1006
    %v1043 = vpop.f32.mrf.mxu0
    %v1044 = vadd.f32 %v964, %v1043
    %v1045 = vpop.f32.mrf.mxu0
    %1046 = vdwg.mxu0
    %1047 = vmatpush.bf16.msra.mxu0 0
    %1048 = vmatpush.bf16.msra.mxu0 %v794
    %1049 = vmatpush.bf16.msra.mxu0 %v773
    %1050 = vmatpush.bf16.msra.mxu0 %v752
    %1051 = vmatpush.bf16.msra.mxu0 %v731
    %1052 = vmatpush.bf16.msra.mxu0 %v710
    %1053 = vmatpush.bf16.msra.mxu0 %v689
    %1054 = vmatpush.bf16.msra.mxu0 %v668
    %1055 = vmatmul.bf16.gmra.mxu0 %v1006
    %v1056 = vpop.f32.mrf.mxu0
    %v1057 = vadd.f32 %v965, %v1056
    %v1058 = vpop.f32.mrf.mxu0
    %1059 = vdwg.mxu0
    %1060 = vmatpush.bf16.msra.mxu0 0
    %1061 = vmatpush.bf16.msra.mxu0 %v795
    %1062 = vmatpush.bf16.msra.mxu0 %v774
    %1063 = vmatpush.bf16.msra.mxu0 %v753
    %1064 = vmatpush.bf16.msra.mxu0 %v732
    %1065 = vmatpush.bf16.msra.mxu0 %v711
    %1066 = vmatpush.bf16.msra.mxu0 %v690
    %1067 = vmatpush.bf16.msra.mxu0 %v669
    %1068 = vmatmul.bf16.gmra.mxu0 %v1006
    %v1069 = vpop.f32.mrf.mxu0
    %v1070 = vadd.f32 %v966, %v1069
    %v1071 = vpop.f32.mrf.mxu0
    %1072 = vdwg.mxu0
    %1073 = vmatpush.bf16.msra.mxu0 0
    %1074 = vmatpush.bf16.msra.mxu0 %v796
    %1075 = vmatpush.bf16.msra.mxu0 %v775
    %1076 = vmatpush.bf16.msra.mxu0 %v754
    %1077 = vmatpush.bf16.msra.mxu0 %v733
    %1078 = vmatpush.bf16.msra.mxu0 %v712
    %1079 = vmatpush.bf16.msra.mxu0 %v691
    %1080 = vmatpush.bf16.msra.mxu0 %v670
    %1081 = vmatmul.bf16.gmra.mxu0 %v1006
    %v1082 = vpop.f32.mrf.mxu0
    %v1083 = vadd.f32 %v967, %v1082
    %v1084 = vpop.f32.mrf.mxu0
    %1085 = vdwg.mxu0
    %1086 = vmatpush.bf16.msra.mxu0 0
    %1087 = vmatpush.bf16.msra.mxu0 %v797
    %1088 = vmatpush.bf16.msra.mxu0 %v776
    %1089 = vmatpush.bf16.msra.mxu0 %v755
    %1090 = vmatpush.bf16.msra.mxu0 %v734
    %1091 = vmatpush.bf16.msra.mxu0 %v713
    %1092 = vmatpush.bf16.msra.mxu0 %v692
    %1093 = vmatpush.bf16.msra.mxu0 %v671
    %1094 = vmatmul.bf16.gmra.mxu0 %v1006
    %v1095 = vpop.f32.mrf.mxu0
    %v1096 = vadd.f32 %v968, %v1095
    %v1097 = vpop.f32.mrf.mxu0
    %1098 = vdwg.mxu0
    %1099 = vmatpush.bf16.msra.mxu0 0
    %1100 = vmatpush.bf16.msra.mxu0 %v798
    %1101 = vmatpush.bf16.msra.mxu0 %v777
    %1102 = vmatpush.bf16.msra.mxu0 %v756
    %1103 = vmatpush.bf16.msra.mxu0 %v735
    %1104 = vmatpush.bf16.msra.mxu0 %v714
    %1105 = vmatpush.bf16.msra.mxu0 %v693
    %1106 = vmatpush.bf16.msra.mxu0 %v672
    %1107 = vmatmul.bf16.gmra.mxu0 %v1006
    %v1108 = vpop.f32.mrf.mxu0
    %v1109 = vadd.f32 %v969, %v1108
    %v1110 = vpop.f32.mrf.mxu0
    %1111 = vdwg.mxu0
    %1112 = vmatpush.bf16.msra.mxu0 0
    %1113 = vmatpush.bf16.msra.mxu0 %v799
    %1114 = vmatpush.bf16.msra.mxu0 %v778
    %1115 = vmatpush.bf16.msra.mxu0 %v757
    %1116 = vmatpush.bf16.msra.mxu0 %v736
    %1117 = vmatpush.bf16.msra.mxu0 %v715
    %1118 = vmatpush.bf16.msra.mxu0 %v694
    %1119 = vmatpush.bf16.msra.mxu0 %v673
    %1120 = vmatmul.bf16.gmra.mxu0 %v1006
    %v1121 = vpop.f32.mrf.mxu0
    %v1122 = vadd.f32 %v970, %v1121
    %v1123 = vpop.f32.mrf.mxu0
    %1124 = vdwg.mxu0
    %1125 = vmatpush.bf16.msra.mxu0 0
    %1126 = vmatpush.bf16.msra.mxu0 %v800
    %1127 = vmatpush.bf16.msra.mxu0 %v779
    %1128 = vmatpush.bf16.msra.mxu0 %v758
    %1129 = vmatpush.bf16.msra.mxu0 %v737
    %1130 = vmatpush.bf16.msra.mxu0 %v716
    %1131 = vmatpush.bf16.msra.mxu0 %v695
    %1132 = vmatpush.bf16.msra.mxu0 %v674
    %1133 = vmatmul.bf16.gmra.mxu0 %v1006
    %v1134 = vpop.f32.mrf.mxu0
    %v1135 = vadd.f32 %v971, %v1134
    %v1136 = vpop.f32.mrf.mxu0
    %1137 = vdwg.mxu0
    %1138 = vmatpush.bf16.msra.mxu0 0
    %1139 = vmatpush.bf16.msra.mxu0 %v801
    %1140 = vmatpush.bf16.msra.mxu0 %v780
    %1141 = vmatpush.bf16.msra.mxu0 %v759
    %1142 = vmatpush.bf16.msra.mxu0 %v738
    %1143 = vmatpush.bf16.msra.mxu0 %v717
    %1144 = vmatpush.bf16.msra.mxu0 %v696
    %1145 = vmatpush.bf16.msra.mxu0 %v675
    %1146 = vmatmul.bf16.gmra.mxu0 %v1006
    %v1147 = vpop.f32.mrf.mxu0
    %v1148 = vadd.f32 %v972, %v1147
    %v1149 = vpop.f32.mrf.mxu0
    %1150 = vdwg.mxu0
    %1151 = vmatpush.bf16.msra.mxu0 0
    %1152 = vmatpush.bf16.msra.mxu0 %v802
    %1153 = vmatpush.bf16.msra.mxu0 %v781
    %1154 = vmatpush.bf16.msra.mxu0 %v760
    %1155 = vmatpush.bf16.msra.mxu0 %v739
    %1156 = vmatpush.bf16.msra.mxu0 %v718
    %1157 = vmatpush.bf16.msra.mxu0 %v697
    %1158 = vmatpush.bf16.msra.mxu0 %v676
    %1159 = vmatmul.bf16.gmra.mxu0 %v1006
    %v1160 = vpop.f32.mrf.mxu0
    %v1161 = vadd.f32 %v973, %v1160
    %v1162 = vpop.f32.mrf.mxu0
    %1163 = vdwg.mxu0
    %1164 = vmatpush.bf16.msra.mxu0 0
    %1165 = vmatpush.bf16.msra.mxu0 %v803
    %1166 = vmatpush.bf16.msra.mxu0 %v782
    %1167 = vmatpush.bf16.msra.mxu0 %v761
    %1168 = vmatpush.bf16.msra.mxu0 %v740
    %1169 = vmatpush.bf16.msra.mxu0 %v719
    %1170 = vmatpush.bf16.msra.mxu0 %v698
    %1171 = vmatpush.bf16.msra.mxu0 %v677
    %1172 = vmatmul.bf16.gmra.mxu0 %v1006
    %v1173 = vpop.f32.mrf.mxu0
    %v1174 = vadd.f32 %v974, %v1173
    %v1175 = vpop.f32.mrf.mxu0
    %1176 = vdwg.mxu0
    %1177 = vmatpush.bf16.msra.mxu0 0
    %1178 = vmatpush.bf16.msra.mxu0 %v804
    %1179 = vmatpush.bf16.msra.mxu0 %v783
    %1180 = vmatpush.bf16.msra.mxu0 %v762
    %1181 = vmatpush.bf16.msra.mxu0 %v741
    %1182 = vmatpush.bf16.msra.mxu0 %v720
    %1183 = vmatpush.bf16.msra.mxu0 %v699
    %1184 = vmatpush.bf16.msra.mxu0 %v678
    %1185 = vmatmul.bf16.gmra.mxu0 %v1006
    %v1186 = vpop.f32.mrf.mxu0
    %v1187 = vadd.f32 %v975, %v1186
    %v1188 = vpop.f32.mrf.mxu0
    %1189 = vdwg.mxu0
    %1190 = vmatpush.bf16.msra.mxu0 0
    %1191 = vmatpush.bf16.msra.mxu0 %v805
    %1192 = vmatpush.bf16.msra.mxu0 %v784
    %1193 = vmatpush.bf16.msra.mxu0 %v763
    %1194 = vmatpush.bf16.msra.mxu0 %v742
    %1195 = vmatpush.bf16.msra.mxu0 %v721
    %1196 = vmatpush.bf16.msra.mxu0 %v700
    %1197 = vmatpush.bf16.msra.mxu0 %v679
    %1198 = vmatmul.bf16.gmra.mxu0 %v1006
    %v1199 = vpop.f32.mrf.mxu0
    %v1200 = vadd.f32 %v976, %v1199
    %v1201 = vpop.f32.mrf.mxu0
    %1202 = vdwg.mxu0
    %1203 = vmatpush.bf16.msra.mxu0 0
    %1204 = vmatpush.bf16.msra.mxu0 %v806
    %1205 = vmatpush.bf16.msra.mxu0 %v785
    %1206 = vmatpush.bf16.msra.mxu0 %v764
    %1207 = vmatpush.bf16.msra.mxu0 %v743
    %1208 = vmatpush.bf16.msra.mxu0 %v722
    %1209 = vmatpush.bf16.msra.mxu0 %v701
    %1210 = vmatpush.bf16.msra.mxu0 %v680
    %1211 = vmatmul.bf16.gmra.mxu0 %v1006
    %v1212 = vpop.f32.mrf.mxu0
    %v1213 = vadd.f32 %v977, %v1212
    %v1214 = vpop.f32.mrf.mxu0
    %1215 = vdwg.mxu0
    %1216 = vmatpush.bf16.msra.mxu0 0
    %1217 = vmatpush.bf16.msra.mxu0 %v807
    %1218 = vmatpush.bf16.msra.mxu0 %v786
    %1219 = vmatpush.bf16.msra.mxu0 %v765
    %1220 = vmatpush.bf16.msra.mxu0 %v744
    %1221 = vmatpush.bf16.msra.mxu0 %v723
    %1222 = vmatpush.bf16.msra.mxu0 %v702
    %1223 = vmatpush.bf16.msra.mxu0 %v681
    %1224 = vmatmul.bf16.gmra.mxu0 %v1006
    %v1225 = vpop.f32.mrf.mxu0
    %v1226 = vadd.f32 %v978, %v1225
    %v1227 = vpop.f32.mrf.mxu0
    %1228 = vdwg.mxu0
    %1229 = vmatpush.bf16.msra.mxu0 0
    %1230 = vmatpush.bf16.msra.mxu0 %v808
    %1231 = vmatpush.bf16.msra.mxu0 %v787
    %1232 = vmatpush.bf16.msra.mxu0 %v766
    %1233 = vmatpush.bf16.msra.mxu0 %v745
    %1234 = vmatpush.bf16.msra.mxu0 %v724
    %1235 = vmatpush.bf16.msra.mxu0 %v703
    %1236 = vmatpush.bf16.msra.mxu0 %v682
    %1237 = vmatmul.bf16.gmra.mxu0 %v1006
    %v1238 = vpop.f32.mrf.mxu0
    %v1239 = vadd.f32 %v979, %v1238
    %v1240 = vpop.f32.mrf.mxu0
    %1241 = vdwg.mxu0
    %1242 = vmatpush.bf16.msra.mxu0 0
    %1243 = vmatpush.bf16.msra.mxu0 %v809
    %1244 = vmatpush.bf16.msra.mxu0 %v788
    %1245 = vmatpush.bf16.msra.mxu0 %v767
    %1246 = vmatpush.bf16.msra.mxu0 %v746
    %1247 = vmatpush.bf16.msra.mxu0 %v725
    %1248 = vmatpush.bf16.msra.mxu0 %v704
    %1249 = vmatpush.bf16.msra.mxu0 %v683
    %1250 = vmatmul.bf16.gmra.mxu0 %v1006
    %v1251 = vpop.f32.mrf.mxu0
    %v1252 = vadd.f32 %v980, %v1251
    %v1253 = vpop.f32.mrf.mxu0
    %1254 = vdwg.mxu0
    %1255 = vmatpush.bf16.msra.mxu0 0
    %1256 = vmatpush.bf16.msra.mxu0 %v810
    %1257 = vmatpush.bf16.msra.mxu0 %v789
    %1258 = vmatpush.bf16.msra.mxu0 %v768
    %1259 = vmatpush.bf16.msra.mxu0 %v747
    %1260 = vmatpush.bf16.msra.mxu0 %v726
    %1261 = vmatpush.bf16.msra.mxu0 %v705
    %1262 = vmatpush.bf16.msra.mxu0 %v684
    %1263 = vmatmul.bf16.gmra.mxu0 %v1006
    %v1264 = vpop.f32.mrf.mxu0
    %v1265 = vadd.f32 %v981, %v1264
    %v1266 = vpop.f32.mrf.mxu0
    %1267 = vdwg.mxu0
    %1268 = vmatpush.bf16.msra.mxu0 0
    %1269 = vmatpush.bf16.msra.mxu0 %v811
    %1270 = vmatpush.bf16.msra.mxu0 %v790
    %1271 = vmatpush.bf16.msra.mxu0 %v769
    %1272 = vmatpush.bf16.msra.mxu0 %v748
    %1273 = vmatpush.bf16.msra.mxu0 %v727
    %1274 = vmatpush.bf16.msra.mxu0 %v706
    %1275 = vmatpush.bf16.msra.mxu0 %v685
    %1276 = vmatmul.bf16.gmra.mxu0 %v1006
    %v1277 = vpop.f32.mrf.mxu0
    %v1278 = vadd.f32 %v982, %v1277
    %v1279 = vpop.f32.mrf.mxu0
    %1280 = vdwg.mxu0
    %v1302 = vrot.slane %v1031, 7
    %v1303 = vrot.slane %v1044, 6
    %v1304 = vrot.slane %v1057, 5
    %v1305 = vrot.slane %v1070, 4
    %v1306 = vrot.slane %v1083, 3
    %v1307 = vrot.slane %v1096, 2
    %v1308 = vrot.slane %v1109, 1
    %v1309 = vrot.slane %v1135, 7
    %v1310 = vrot.slane %v1148, 6
    %v1311 = vrot.slane %v1161, 5
    %v1312 = vrot.slane %v1174, 4
    %v1313 = vrot.slane %v1187, 3
    %v1314 = vrot.slane %v1200, 2
    %v1315 = vrot.slane %v1213, 1
    %v1316 = vrot.slane %v1239, 7
    %v1317 = vrot.slane %v1252, 6
    %v1318 = vrot.slane %v1265, 5
    %v1319 = vrot.slane %v1278, 4
    %vm1320 = vcmask 1040384
    %v1321 = vsel %vm1320, %v1018, %v1302
    %vm1322 = vcmask 1042434
    %v1323 = vsel %vm1322, %v1303, %v1304
    %vm1324 = vcmask 1041408
    %v1325 = vsel %vm1324, %v1321, %v1323
    %vm1326 = vcmask 1044484
    %v1327 = vsel %vm1326, %v1305, %v1306
    %vm1328 = vcmask 1046534
    %v1329 = vsel %vm1328, %v1307, %v1308
    %vm1330 = vcmask 1045508
    %v1331 = vsel %vm1330, %v1327, %v1329
    %vm1332 = vcmask 1043456
    %v1333 = vsel %vm1332, %v1325, %v1331
    %v1334 = vsel %vm1320, %v1122, %v1309
    %v1335 = vsel %vm1322, %v1310, %v1311
    %v1336 = vsel %vm1324, %v1334, %v1335
    %v1337 = vsel %vm1326, %v1312, %v1313
    %v1338 = vsel %vm1328, %v1314, %v1315
    %v1339 = vsel %vm1330, %v1337, %v1338
    %v1340 = vsel %vm1332, %v1336, %v1339
    %v1341 = vsel %vm1320, %v1226, %v1316
    %v1342 = vsel %vm1324, %v1341, %v1317
    %vm1343 = vcmask 1043459
    %v1344 = vsel %vm1343, %v1318, %v1319
    %vm1345 = vcmask 1042432
    %v1346 = vsel %vm1345, %v1342, %v1344
    %1350 = vst [vmem:[#allocation8] sm:$0xff] %v1333
    %1351 = vst [vmem:[#allocation8 + $0x8] sm:$0xff] %v1340
    %v1352 = vlaneseq
    %vm1353 = vcmp.ge.s32.totalorder %v1352, 0
    %vm1354 = vcmp.lt.s32.totalorder %v1352, 640
    %vm1355 = vmand %vm1353, %vm1354
    %1356 = vst.msk [vmem:[#allocation8 + $0x10] sm:$0x1f] %vm1355, %v1346
    // Predicated region
    $region26: #{tpu_custom_call.1} parent=1 // pred_check
      _
    $region27: #{tpu_custom_call.1} parent=1 // pred_check_branch
      %1358 = sbr.rel (0) target = $region29
    $region28: #{tpu_custom_call.1} parent=1 // pred_region
      %1360 = vsyncadd [#allocation4], 0
      %s1362 = sshll.u32 [#allocation8], 4
      %s1363 = int_to_ptr.vmem [resolvable:$true] %s1362
      %s1364 = sshll.u32 %s3, 4
      %s1365 = int_to_ptr.hbm [resolvable:$true] %s1364
      %1367 = dma.vmem_to_hbm [thread:$0]  %s1363, 336, %s1365, [#allocation4]
    $region29: #{tpu_custom_call.1} parent=1 // pred_fallthru
      _
    // Predicated region
    $region30: #{tpu_custom_call.1} parent=1 // pred_check
      _
    $region31: #{tpu_custom_call.1} parent=1 // pred_check_branch
      %1369 = sbr.rel (0) target = $region33
    $region32: #{tpu_custom_call.1} parent=1 // pred_region
      %1371 = dma.done [#allocation4], 336
    $region33: #{tpu_custom_call.1} parent=1 // pred_fallthru
      _
    %1372 = vsyncpa [#allocation3], 1
    %1373 = vsyncpa [#allocation6], 1
    %1374 = vsyncpa [#allocation4], 1

</llo_original>
